<compile_context>
chip_gen: v6e
topology: v6e:2x2x1
jax: 0.10.0
libtpu: 0.0.40
codegen_flags: <defaults>
</compile_context>

<pallas_src>
import math

import jax
import jax.numpy as jnp
from jax.experimental import pallas as pl
from jax.experimental.pallas import tpu as pltpu


_MAX_VMEM_LIMIT = 64 * 1024 * 1024      # never ask for more than 64 MiB scope
_MAX_INPUT_TILE = 16 * 1024 * 1024      # cap on per-step input-tile bytes


def _vmem_budget():
    """Chip-aware (VMEM scope limit, target input-tile bytes)."""
    cap = 64 * 1024 * 1024              # conservative default == v7x per-TC VMEM
    try:
        info = pltpu.get_tpu_info()
        cap = int(getattr(info, "vmem_capacity_bytes", cap)) or cap
    except Exception:
        pass
    limit = min((cap * 3) // 4, _MAX_VMEM_LIMIT)   # v5e/v6e -> 64 MiB, v7x -> 48 MiB
    target = min(limit // 6, _MAX_INPUT_TILE)      # ~3x(in+out), double-buffered, fits
    return limit, target


def _sublane_align(*dtypes):
    """Row-tile alignment: 8 for f32, 16 for bf16, 32 for 8-bit dtypes."""
    min_isz = min(jnp.dtype(d).itemsize for d in dtypes)
    return max(8, 32 // max(min_isz, 1))


def _pick_row_tile(rows, row_in_bytes, align, target_bytes):
    """Rows per grid step: ~target_bytes of input per tile, sublane-aligned."""
    # TODO(synk): no 2-D (row, column) tiling fallback for absurdly wide rows
    # (single row > target); unrealistic for embedding-sized E.
    tm = target_bytes // max(row_in_bytes, 1)
    if tm >= rows:
        return rows                      # single full block (always legal)
    return max(align, (tm // align) * align)


def _compiler_params(vmem_limit):
    return pltpu.CompilerParams(
        dimension_semantics=("parallel",),   # v7x: shard row tiles across both TCs
        vmem_limit_bytes=vmem_limit,
    )


# --------------------------------------------------------------------------
# Kernels
# --------------------------------------------------------------------------
def _make_fused_kernel(chunk):
    """words=False path.

    x_ref: (tm, 2*W) raw dtype; each folded row is [L_0|R_0|L_1|R_1|...] with
           chunks of width `chunk` (== E) and W == F*chunk.
    w_ref: (1, 2*W) f32  == tile([sigmoid(comp_l*c) | sigmoid(comp_r*c)], F)
    b_ref: (1, W)   f32  == tile(cb*c, F)
    o_ref: (tm, W)  out dtype, lane-dense.
    """
    def kernel(x_ref, w_ref, b_ref, o_ref):
        a = x_ref[...].astype(jnp.float32) * w_ref[...]
        W = o_ref.shape[-1]
        F = W // chunk
        pieces = [
            a[:, 2 * f * chunk:(2 * f + 1) * chunk]
            + a[:, (2 * f + 1) * chunk:(2 * f + 2) * chunk]
            for f in range(F)
        ]
        s = pieces[0] if F == 1 else jnp.concatenate(pieces, axis=-1)
        o_ref[...] = (s + b_ref[...]).astype(o_ref.dtype)

    return kernel


def _pair_kernel(l_ref, r_ref, wl_ref, wr_ref, b_ref, o_ref):
    """words=True path: purely elementwise on separate left/right streams."""
    o = (l_ref[...].astype(jnp.float32) * wl_ref[...]
         + r_ref[...].astype(jnp.float32) * wr_ref[...]
         + b_ref[...])
    o_ref[...] = o.astype(o_ref.dtype)


# --------------------------------------------------------------------------
# pallas_call runners
# --------------------------------------------------------------------------
def _run_fused(x2, w_pat, b_pat, chunk, out_dtype, row_tile=None):
    rows, two_w = x2.shape
    W = two_w // 2
    limit, target = _vmem_budget()
    align = _sublane_align(x2.dtype, out_dtype)
    tm = row_tile if row_tile is not None else _pick_row_tile(
        rows, two_w * x2.dtype.itemsize, align, target)
    tm = min(tm, rows)
    grid = (pl.cdiv(rows, tm),)

    cost = pl.CostEstimate(
        flops=4 * rows * W,
        transcendentals=0,
        bytes_accessed=(x2.size * x2.dtype.itemsize
                        + rows * W * jnp.dtype(out_dtype).itemsize
                        + (w_pat.size + b_pat.size) * 4),
    )
    grid_spec = pltpu.PrefetchScalarGridSpec(
        num_scalar_prefetch=0,
        grid=grid,
        in_specs=[
            pl.BlockSpec((tm, two_w), lambda i: (i, 0)),
            pl.BlockSpec((1, two_w), lambda i: (0, 0)),
            pl.BlockSpec((1, W), lambda i: (0, 0)),
        ],
        out_specs=pl.BlockSpec((tm, W), lambda i: (i, 0)),
    )
    return pl.pallas_call(
        _make_fused_kernel(chunk),
        out_shape=jax.ShapeDtypeStruct((rows, W), out_dtype),
        grid_spec=grid_spec,
        compiler_params=_compiler_params(limit),
        cost_estimate=cost,
    )(x2, w_pat, b_pat)


def _run_pair(lf, rf, wl_pat, wr_pat, b_pat, out_dtype, row_tile=None):
    rows, W = lf.shape
    limit, target = _vmem_budget()
    align = _sublane_align(lf.dtype, rf.dtype, out_dtype)
    row_in_bytes = W * (lf.dtype.itemsize + rf.dtype.itemsize)
    tm = row_tile if row_tile is not None else _pick_row_tile(
        rows, row_in_bytes, align, target)
    tm = min(tm, rows)
    grid = (pl.cdiv(rows, tm),)

    cost = pl.CostEstimate(
        flops=4 * rows * W,
        transcendentals=0,
        bytes_accessed=(lf.size * lf.dtype.itemsize
                        + rf.size * rf.dtype.itemsize
                        + rows * W * jnp.dtype(out_dtype).itemsize
                        + (wl_pat.size + wr_pat.size + b_pat.size) * 4),
    )
    grid_spec = pltpu.PrefetchScalarGridSpec(
        num_scalar_prefetch=0,
        grid=grid,
        in_specs=[
            pl.BlockSpec((tm, W), lambda i: (i, 0)),
            pl.BlockSpec((tm, W), lambda i: (i, 0)),
            pl.BlockSpec((1, W), lambda i: (0, 0)),
            pl.BlockSpec((1, W), lambda i: (0, 0)),
            pl.BlockSpec((1, W), lambda i: (0, 0)),
        ],
        out_specs=pl.BlockSpec((tm, W), lambda i: (i, 0)),
    )
    return pl.pallas_call(
        _pair_kernel,
        out_shape=jax.ShapeDtypeStruct((rows, W), out_dtype),
        grid_spec=grid_spec,
        compiler_params=_compiler_params(limit),
        cost_estimate=cost,
    )(lf, rf, wl_pat, wr_pat, b_pat)


# --------------------------------------------------------------------------
# Public forward
# --------------------------------------------------------------------------
def _base_patterns(comp_l, comp_r, cb, c):
    """sigmoid once on tiny (e,) params, tiled to per-row width E = c*e (f32)."""
    wl = jnp.tile(jax.nn.sigmoid(comp_l.astype(jnp.float32)), c)
    wr = jnp.tile(jax.nn.sigmoid(comp_r.astype(jnp.float32)), c)
    b = jnp.tile(cb.astype(jnp.float32), c)
    return wl, wr, b


def compose_forward(in_feats, comp_l, comp_r, cb, words=False, row_tile=None):
    """JAX/Pallas equivalent of Compose.forward (eval mode)."""
    e = comp_l.shape[0]
    # TODO(synk): nn.Dropout(p=0.1) training-mode masking is not reproduced;
    # eval-mode identity semantics are used.

    if words:
        left, right = in_feats
        c = left.shape[-2]
        E = c * e
        out_dtype = jnp.result_type(left.dtype, jnp.float32)
        wl, wr, b = _base_patterns(comp_l, comp_r, cb, c)

        numel = left.size
        F = math.lcm(E, 128) // E
        if not (F > 1 and numel % (F * E) == 0):
            F = 1
        W = F * E
        lf = left.reshape(-1, W)        # free views (contiguous, same dtype)
        rf = right.reshape(-1, W)
        wl_pat = jnp.tile(wl, F)[None, :]
        wr_pat = jnp.tile(wr, F)[None, :]
        b_pat = jnp.tile(b, F)[None, :]
        out = _run_pair(lf, rf, wl_pat, wr_pat, b_pat, out_dtype, row_tile)
        return out.reshape(-1, E)

    N, children, c, e_in = in_feats.shape
    assert children == 2, "Expected to have only 2 children"
    assert e_in == e
    E = c * e
    out_dtype = jnp.result_type(in_feats.dtype, jnp.float32)
    wl, wr, b = _base_patterns(comp_l, comp_r, cb, c)

    # Fold F rows into the lane axis so blocks are lane-dense (last dim % 128 == 0).
    F = math.lcm(E, 128) // E
    if not (F > 1 and N % F == 0):
        F = 1
    rows = N // F
    W = F * E

    # Free view of the contiguous (N, 2, c, e) input: each folded row is
    # [L_0 | R_0 | L_1 | R_1 | ...] with E-wide chunks.
    x2 = in_feats.reshape(rows, 2 * W)
    w_pat = jnp.tile(jnp.concatenate([wl, wr]), F)[None, :]   # (1, 2W)
    b_pat = jnp.tile(b, F)[None, :]                           # (1, W)

    out = _run_fused(x2, w_pat, b_pat, E, out_dtype, row_tile)
    return out.reshape(N, E)


# --------------------------------------------------------------------------
# Self-test
# --------------------------------------------------------------------------
if __name__ == "__main__":
    # Module-consistent small shapes: E=32, c=4 -> e=8, batch N=2.
    E, c = 32, 4
    e = E // c
    N = 2

    key = jax.random.PRNGKey(0)
    k_in, k_l, k_r, k_big = jax.random.split(key, 4)

    # Parameter init mirroring __init__: uniform(0.6, 0.9), zeros.
    comp_l = jax.random.uniform(k_l, (e,), minval=0.6, maxval=0.9,
                                dtype=jnp.float32)
    comp_r = jax.random.uniform(k_r, (e,), minval=0.6, maxval=0.9,
                                dtype=jnp.float32)
    cb = jnp.zeros((e,), dtype=jnp.float32)

    def reference(x):
        t = jnp.transpose(x, (1, 0, 2, 3)).astype(jnp.float32)
        return (t[0] * jax.nn.sigmoid(comp_l)
                + t[1] * jax.nn.sigmoid(comp_r) + cb).reshape(-1, E)

    # 1) Small batch, words=False (non-folded path: full-dim blocks).
    in_feats = jax.random.normal(k_in, (N, 2, c, e), dtype=jnp.float32)
    out = jax.block_until_ready(compose_forward(in_feats, comp_l, comp_r, cb))
    ref = reference(in_feats)
    assert out.shape == (N, E)
    assert jnp.allclose(out, ref, atol=1e-6, rtol=1e-6)

    # 2) words=True path (separate left/right arrays).
    out_w = jax.block_until_ready(
        compose_forward((in_feats[:, 0], in_feats[:, 1]),
                        comp_l, comp_r, cb, words=True))
    ref_w = (in_feats[:, 0] * jax.nn.sigmoid(comp_l)
             + in_feats[:, 1] * jax.nn.sigmoid(comp_r) + cb).reshape(-1, E)
    assert jnp.allclose(out_w, ref_w, atol=1e-6, rtol=1e-6)

    # 3) Larger batch: lane-dense folded path (F=4 -> 128-lane blocks),
    #    multi-step grid with a ragged trailing tile (row_tile forced small).
    N_big = 4100
    in_big = jax.random.normal(k_big, (N_big, 2, c, e), dtype=jnp.float32)
    out_big = jax.block_until_ready(
        compose_forward(in_big, comp_l, comp_r, cb, row_tile=256))
    ref_big = reference(in_big)
    assert out_big.shape == (N_big, E)
    assert jnp.allclose(out_big, ref_big, atol=1e-6, rtol=1e-6)

    # 4) bf16 input streamed in its narrow dtype (cast only inside the kernel).
    in_bf16 = in_big.astype(jnp.bfloat16)
    out_bf = jax.block_until_ready(
        compose_forward(in_bf16, comp_l, comp_r, cb))
    ref_bf = reference(in_bf16.astype(jnp.float32))
    assert out_bf.dtype == jnp.float32
    assert jnp.allclose(out_bf, ref_bf, atol=1e-5, rtol=1e-5)

    print("KERNEL_OK")
</pallas_src>

<mosaic_0001>
module attributes {stable_mosaic.version = 11 : i64} {
  func.func @kernel(%arg0: i32, %arg1: memref<2x64xf32, #tpu.memory_space<vmem>>, %arg2: memref<1x64xf32, #tpu.memory_space<vmem>>, %arg3: memref<1x32xf32, #tpu.memory_space<vmem>>, %arg4: memref<2x32xf32, #tpu.memory_space<vmem>>) attributes {dimension_semantics = [#tpu.dimension_semantics<parallel>], iteration_bounds = array<i64: 1>, scalar_prefetch = 0 : i64, scratch_operands = 0 : i64, tpu.core_type = #tpu.core_type<tc>, window_params = [{transform_indices = @transform_0, window_bounds = array<i64: 2, 64>}, {pipeline_mode = #tpu.pipeline_mode<synchronous>, transform_indices = @transform_1, window_bounds = array<i64: 1, 64>}, {pipeline_mode = #tpu.pipeline_mode<synchronous>, transform_indices = @transform_2, window_bounds = array<i64: 1, 32>}, {transform_indices = @transform_3, window_bounds = array<i64: 2, 32>}]} {
    %c0 = arith.constant 0 : index
    %c0_0 = arith.constant 0 : index
    %0 = vector.load %arg1[%c0, %c0_0] : memref<2x64xf32, #tpu.memory_space<vmem>>, vector<2x64xf32>
    %c0_1 = arith.constant 0 : index
    %c0_2 = arith.constant 0 : index
    %1 = vector.load %arg2[%c0_1, %c0_2] : memref<1x64xf32, #tpu.memory_space<vmem>>, vector<1x64xf32>
    %2 = vector.broadcast %1 : vector<1x64xf32> to vector<2x64xf32>
    %3 = arith.mulf %0, %2 : vector<2x64xf32>
    %4 = vector.extract_strided_slice %3 {offsets = [0, 0], sizes = [2, 32], strides = [1, 1]} : vector<2x64xf32> to vector<2x32xf32>
    %5 = vector.extract_strided_slice %3 {offsets = [0, 32], sizes = [2, 32], strides = [1, 1]} : vector<2x64xf32> to vector<2x32xf32>
    %6 = arith.addf %4, %5 : vector<2x32xf32>
    %c0_3 = arith.constant 0 : index
    %c0_4 = arith.constant 0 : index
    %7 = vector.load %arg3[%c0_3, %c0_4] : memref<1x32xf32, #tpu.memory_space<vmem>>, vector<1x32xf32>
    %8 = vector.broadcast %7 : vector<1x32xf32> to vector<2x32xf32>
    %9 = arith.addf %6, %8 : vector<2x32xf32>
    %c0_5 = arith.constant 0 : index
    %c0_6 = arith.constant 0 : index
    %10 = vector.load %arg4[%c0_5, %c0_6] : memref<2x32xf32, #tpu.memory_space<vmem>>, vector<2x32xf32>
    tpu.vector_store %arg4[%c0_5, %c0_6], %9 {strides = array<i32>} : memref<2x32xf32, #tpu.memory_space<vmem>>, vector<2x32xf32>,
    return
  }
  func.func @transform_0(%arg0: i32) -> (i32, i32) {
    %c0_i32 = arith.constant 0 : i32
    %c0_i32_0 = arith.constant 0 : i32
    return %arg0, %c0_i32 : i32, i32
  }
  func.func @transform_1(%arg0: i32) -> (i32, i32) {
    %c0_i32 = arith.constant 0 : i32
    %c0_i32_0 = arith.constant 0 : i32
    %c0_i32_1 = arith.constant 0 : i32
    return %c0_i32, %c0_i32_0 : i32, i32
  }
  func.func @transform_2(%arg0: i32) -> (i32, i32) {
    %c0_i32 = arith.constant 0 : i32
    %c0_i32_0 = arith.constant 0 : i32
    %c0_i32_1 = arith.constant 0 : i32
    return %c0_i32, %c0_i32_0 : i32, i32
  }
  func.func @transform_3(%arg0: i32) -> (i32, i32) {
    %c0_i32 = arith.constant 0 : i32
    %c0_i32_0 = arith.constant 0 : i32
    return %arg0, %c0_i32 : i32, i32
  }
}

</mosaic_0001>

<llo_original>
// kernel: tpu_custom_call.1
$region0: #{tpu_custom_call.1}
  #allocation0 [shape = 'u32[]', space=smem, size = 0x4, offset = 0x4, fixed_abs, tag = 'smem constant byte address 0x4 - core index']
  #allocation1 [shape = 'u32[144,128]{1,0:T(1,128)}', space=vmem, size = 0x12000, scoped, tag = 'internal scratch']
  %s0 = inlined_call_operand.hbm [shape: f32[2,64], index: 0, kind: input, shape index: {}]
  %s1 = inlined_call_operand.vmem [shape: f32[1,64], index: 1, kind: input, shape index: {}]
  %s2 = inlined_call_operand.vmem [shape: f32[1,32], index: 2, kind: input, shape index: {}]
  %s3 = inlined_call_operand.hbm [shape: f32[2,32], index: 3, kind: output, shape index: {}]
  %s4 = sld [smem:[#allocation0]]
  $region26: #{tpu_custom_call.1} parent=0
    _
  %s6 = ssub.s32 1, %s4
  %s7 = scalar_select 0, %s6, %s4
  $region1: #{tpu_custom_call.1} parent=0
    #allocation2 [shape = 'u8[1024]{0}', space=vmem, size = 0x400, scoped, tag = 'input window, operand 0, single buffered']
    #allocation3 [shape = 's32[1]{0}', space=sflag, size = 0x4, scoped, tag = 'scoped memory for tpu_custom_call.1']
    #allocation4 [shape = 's32[1]{0}', space=sflag, size = 0x4, scoped, tag = 'scoped memory for tpu_custom_call.1']
    #allocation5 [shape = 'u8[1024]{0}', space=vmem, size = 0x400, scoped, tag = 'output window, operand 0, single buffered']
    %8 = vsyncpa [#allocation3], 0
    %9 = vsyncpa [#allocation4], 0
    // Predicated region
    $region2: #{tpu_custom_call.1} parent=1 // pred_check
      _
    $region3: #{tpu_custom_call.1} parent=1 // pred_check_branch
      %11 = sbr.rel (0) target = $region5
    $region4: #{tpu_custom_call.1} parent=1 // pred_region
      %s13 = ssub.s32 32, 32
      %14 = vsyncadd [#allocation3], %s13
      %s16 = sshll.u32 [#allocation2], 4
      %s17 = int_to_ptr.vmem [resolvable:$true] %s16
      %19 = dma.hbm_to_vmem [thread:$0]  %s0, 32, %s17, [#allocation3]
    $region5: #{tpu_custom_call.1} parent=1 // pred_fallthru
      _
    // Predicated region
    $region6: #{tpu_custom_call.1} parent=1 // pred_check
      _
    $region7: #{tpu_custom_call.1} parent=1 // pred_check_branch
      %21 = sbr.rel (0) target = $region9
    $region8: #{tpu_custom_call.1} parent=1 // pred_region
      _
    $region9: #{tpu_custom_call.1} parent=1 // pred_fallthru
      _
    // Predicated region
    $region10: #{tpu_custom_call.1} parent=1 // pred_check
      _
    $region11: #{tpu_custom_call.1} parent=1 // pred_check_branch
      %23 = sbr.rel (0) target = $region13
    $region12: #{tpu_custom_call.1} parent=1 // pred_region
      _
    $region13: #{tpu_custom_call.1} parent=1 // pred_fallthru
      _
    // Predicated region
    $region14: #{tpu_custom_call.1} parent=1 // pred_check
      _
    $region15: #{tpu_custom_call.1} parent=1 // pred_check_branch
      %25 = sbr.rel (0) target = $region17
    $region16: #{tpu_custom_call.1} parent=1 // pred_region
      %26 = dma.done [#allocation3], 32
    $region17: #{tpu_custom_call.1} parent=1 // pred_fallthru
      _
    %v27 = vld [vmem:[#allocation2] sm:$0x3]
    %v28 = vld [vmem:[%s1] sm:$0x1]
    %v30 = vlaneseq
    %v31 = vshrl.u32 %v30, 7
    %v32 = vsub.s32 0, %v31
    %v33 = vrot.slane %v28, %v32
    %v35 = vmul.f32 %v27, %v33
    %37 = vrot.lane.b32.xlu0 %v35, 96
    %v38 = vpop.permute.xlu0 %37
    %v40 = vadd.f32 %v35, %v38
    %v41 = vld [vmem:[%s2] sm:$0x1]
    %v43 = vlaneseq
    %v44 = vshrl.u32 %v43, 7
    %v45 = vsub.s32 0, %v44
    %v46 = vrot.slane %v41, %v45
    %v48 = vadd.f32 %v40, %v46
    %vm49 = vcmask 254976
    %50 = vst.msk [vmem:[#allocation5] sm:$0x3] %vm49, %v48
    // Predicated region
    $region18: #{tpu_custom_call.1} parent=1 // pred_check
      _
    $region19: #{tpu_custom_call.1} parent=1 // pred_check_branch
      %52 = sbr.rel (0) target = $region21
    $region20: #{tpu_custom_call.1} parent=1 // pred_region
      %s54 = ssub.s32 32, 32
      %55 = vsyncadd [#allocation4], %s54
      %s57 = sshll.u32 [#allocation5], 4
      %s58 = int_to_ptr.vmem [resolvable:$true] %s57
      %60 = dma.vmem_to_hbm [thread:$0]  %s58, 32, %s3, [#allocation4]
    $region21: #{tpu_custom_call.1} parent=1 // pred_fallthru
      _
    // Predicated region
    $region22: #{tpu_custom_call.1} parent=1 // pred_check
      _
    $region23: #{tpu_custom_call.1} parent=1 // pred_check_branch
      %62 = sbr.rel (0) target = $region25
    $region24: #{tpu_custom_call.1} parent=1 // pred_region
      %63 = dma.done [#allocation4], 32
    $region25: #{tpu_custom_call.1} parent=1 // pred_fallthru
      _
    %64 = vsyncpa [#allocation3], 1
    %65 = vsyncpa [#allocation4], 1

</llo_original>
